<compile_context>
chip_gen: v6e
topology: v6e:2x2x1
jax: 0.10.0
libtpu: 0.0.40
codegen_flags: <defaults>
</compile_context>

<pallas_src>
import jax
import jax.numpy as jnp
from jax.experimental import pallas as pl
from jax.experimental.pallas import tpu as pltpu


def _normalize_kernel(x_ref, stats_ref, o_ref):
    # x_ref/o_ref: (br, bl) block of the flattened (N*C, H*W) view.
    # stats_ref:   (br, 2) f32; column 0 = per-row mean, column 1 = 1/std.
    x = x_ref[...]
    mean = stats_ref[:, 0:1]
    inv_std = stats_ref[:, 1:2]
    o_ref[...] = ((x - mean) * inv_std).astype(o_ref.dtype)


def _round_down(v, m):
    return (v // m) * m


def _round_up(v, m):
    return ((v + m - 1) // m) * m


def normalize_input(x, mean, std, *,
                    target_block_bytes=4 * 1024 * 1024,
                    megacore_min_bytes=1 * 1024 * 1024,
                    donate_input=False):
    """(x - mean[c]) / std[c] with x in NCHW and mean/std of shape (C,)."""
    N, C, H, W = x.shape
    R, L = N * C, H * W
    itemsize = jnp.dtype(x.dtype).itemsize

    # Lane-dense 2-D view (free metadata reshape for contiguous NCHW).
    xf = x.reshape(R, L)

    # Per-row stats packed into one (R, 2) f32 array; row index = n*C + c.
    mean_f32 = jnp.asarray(mean, jnp.float32).reshape(C)
    inv_std_f32 = (1.0 / jnp.asarray(std, jnp.float32)).reshape(C)
    stats = jnp.tile(jnp.stack([mean_f32, inv_std_f32], axis=-1), (N, 1))  # (R, 2)

    # ---- lane (last-dim) tile --------------------------------------------
    # Prefer a full row per block: fully contiguous HBM DMAs, no lane grid
    # axis. Only lane-split when the minimum legal row-group (8 rows, or R if
    # R < 8) would exceed the per-block VMEM budget.
    min_rows = R if R < 8 else 8
    L_work = L
    padded = False
    if min_rows * L * itemsize <= target_block_bytes:
        bl = L_work
    else:
        if L % 128 != 0:
            # Large, non-128-multiple H*W: pad the lane dim so we can lane-
            # split legally instead of taking a full-extent block that could
            # blow scoped VMEM (hard failure on v7x's 64 MiB).
            # TODO(synk): the pad/slice costs one extra HBM copy; a layout-
            # aware re-factorization of H*W would avoid it.
            L_work = _round_up(L, 128)
            xf = jnp.pad(xf, ((0, 0), (0, L_work - L)))
            padded = True
        bl = _round_down(target_block_bytes // (min_rows * itemsize), 128)
        bl = max(128, min(bl, L_work))

    # ---- row (second-to-last dim) tile -------------------------------------
    rows_per_block = target_block_bytes // (bl * itemsize)
    if rows_per_block >= R:
        br = R                                   # full extent (always legal)
    else:
        br = max(8, _round_down(rows_per_block, 8))

    num_i, num_j = pl.cdiv(R, br), pl.cdiv(L_work, bl)

    # ---- megacore guard -----------------------------------------------------
    # v7x has 2 TensorCores; a "parallel" axis only shards with >= 2 grid
    # steps. If everything collapsed into one block but the array is big
    # enough to matter, split it in two.
    total_bytes = R * L_work * itemsize
    if num_i * num_j == 1 and total_bytes > megacore_min_bytes:
        if R > 8:
            br = max(8, _round_up(pl.cdiv(R, 2), 8))
        elif L_work % 128 == 0 and L_work >= 256:
            bl = max(128, _round_up(pl.cdiv(L_work, 2), 128))
        num_i, num_j = pl.cdiv(R, br), pl.cdiv(L_work, bl)

    # ---- grid / specs -------------------------------------------------------
    if num_j == 1:
        grid = (num_i,)
        in_specs = [
            pl.BlockSpec((br, bl), lambda i: (i, 0)),   # x rows (full-row slab)
            pl.BlockSpec((br, 2), lambda i: (i, 0)),    # packed per-row stats
        ]
        out_specs = pl.BlockSpec((br, bl), lambda i: (i, 0))
        dim_sem = ("parallel",)
    else:
        grid = (num_i, num_j)
        in_specs = [
            pl.BlockSpec((br, bl), lambda i, j: (i, j)),
            pl.BlockSpec((br, 2), lambda i, j: (i, 0)),
        ]
        out_specs = pl.BlockSpec((br, bl), lambda i, j: (i, j))
        dim_sem = ("parallel", "parallel")

    extra_kwargs = {}
    if donate_input and not padded:
        extra_kwargs["input_output_aliases"] = {0: 0}

    out_flat = pl.pallas_call(
        _normalize_kernel,
        out_shape=jax.ShapeDtypeStruct((R, L_work), x.dtype),
        grid=grid,
        in_specs=in_specs,
        out_specs=out_specs,
        compiler_params=pltpu.CompilerParams(
            dimension_semantics=dim_sem,
            # in + out double-buffered at 4 MiB blocks ~= 16 MiB: comfortably
            # inside this 32 MiB limit on every generation (also overrides
            # v5e's 16 MiB scoped default).
            vmem_limit_bytes=32 * 1024 * 1024,
        ),
        **extra_kwargs,
    )(xf, stats)

    if padded:
        out_flat = out_flat[:, :L]
    return out_flat.reshape(N, C, H, W)


if __name__ == "__main__":
    # Deterministic buffers matching the PyTorch module defaults (CIFAR-10 stats).
    mean = jnp.array([0.4914, 0.4822, 0.4465], dtype=jnp.float32)
    std = jnp.array([0.2023, 0.1994, 0.201], dtype=jnp.float32)

    key = jax.random.PRNGKey(0)
    x = jax.random.uniform(key, (2, 3, 16, 16), dtype=jnp.float32)  # NCHW

    out = jax.block_until_ready(normalize_input(x, mean, std))
    ref = (x - mean.reshape(1, -1, 1, 1)) / std.reshape(1, -1, 1, 1)
    assert out.shape == x.shape and out.dtype == x.dtype
    # Multiply-by-reciprocal differs from true division by <= ~1-2 ulp.
    assert jnp.max(jnp.abs(out - ref)) < 1e-5

    # Exercise the multi-block (megacore-split) path on a medium input.
    x2 = jax.random.uniform(jax.random.PRNGKey(0), (8, 3, 128, 256), dtype=jnp.float32)
    out2 = jax.block_until_ready(normalize_input(x2, mean, std))
    ref2 = (x2 - mean.reshape(1, -1, 1, 1)) / std.reshape(1, -1, 1, 1)
    assert jnp.max(jnp.abs(out2 - ref2)) < 1e-5

    print("KERNEL_OK")
</pallas_src>

<mosaic_0001>
module attributes {stable_mosaic.version = 11 : i64} {
  func.func @_normalize_kernel(%arg0: i32, %arg1: memref<6x256xf32, #tpu.memory_space<vmem>>, %arg2: memref<6x2xf32, #tpu.memory_space<vmem>>, %arg3: memref<6x256xf32, #tpu.memory_space<vmem>>) attributes {dimension_semantics = [#tpu.dimension_semantics<parallel>], iteration_bounds = array<i64: 1>, scalar_prefetch = 0 : i64, scratch_operands = 0 : i64, tpu.core_type = #tpu.core_type<tc>, window_params = [{transform_indices = @transform_0, window_bounds = array<i64: 6, 256>}, {transform_indices = @transform_1, window_bounds = array<i64: 6, 2>}, {transform_indices = @transform_2, window_bounds = array<i64: 6, 256>}]} {
    %c0 = arith.constant 0 : index
    %c0_0 = arith.constant 0 : index
    %0 = vector.load %arg1[%c0, %c0_0] : memref<6x256xf32, #tpu.memory_space<vmem>>, vector<6x256xf32>
    %c0_1 = arith.constant 0 : index
    %c0_2 = arith.constant 0 : index
    %1 = vector.load %arg2[%c0_1, %c0_2] : memref<6x2xf32, #tpu.memory_space<vmem>>, vector<6x1xf32>
    %c0_3 = arith.constant 0 : index
    %c1 = arith.constant 1 : index
    %2 = vector.load %arg2[%c0_3, %c1] : memref<6x2xf32, #tpu.memory_space<vmem>>, vector<6x1xf32>
    %3 = vector.broadcast %1 : vector<6x1xf32> to vector<6x256xf32>
    %4 = arith.subf %0, %3 : vector<6x256xf32>
    %5 = vector.broadcast %2 : vector<6x1xf32> to vector<6x256xf32>
    %6 = arith.mulf %4, %5 : vector<6x256xf32>
    %c0_4 = arith.constant 0 : index
    %c0_5 = arith.constant 0 : index
    %7 = vector.load %arg3[%c0_4, %c0_5] : memref<6x256xf32, #tpu.memory_space<vmem>>, vector<6x256xf32>
    tpu.vector_store %arg3[%c0_4, %c0_5], %6 {strides = array<i32>} : memref<6x256xf32, #tpu.memory_space<vmem>>, vector<6x256xf32>,
    return
  }
  func.func @transform_0(%arg0: i32) -> (i32, i32) {
    %c0_i32 = arith.constant 0 : i32
    %c0_i32_0 = arith.constant 0 : i32
    return %arg0, %c0_i32 : i32, i32
  }
  func.func @transform_1(%arg0: i32) -> (i32, i32) {
    %c0_i32 = arith.constant 0 : i32
    %c0_i32_0 = arith.constant 0 : i32
    return %arg0, %c0_i32 : i32, i32
  }
  func.func @transform_2(%arg0: i32) -> (i32, i32) {
    %c0_i32 = arith.constant 0 : i32
    %c0_i32_0 = arith.constant 0 : i32
    return %arg0, %c0_i32 : i32, i32
  }
}

</mosaic_0001>

<llo_original>
// kernel: tpu_custom_call.1
$region0: #{tpu_custom_call.1}
  #allocation0 [shape = 'u32[]', space=smem, size = 0x4, offset = 0x4, fixed_abs, tag = 'smem constant byte address 0x4 - core index']
  #allocation1 [shape = 'u32[144,128]{1,0:T(1,128)}', space=vmem, size = 0x12000, scoped, tag = 'internal scratch']
  %s0 = inlined_call_operand.hbm [shape: f32[6,256], index: 0, kind: input, shape index: {}]
  %s1 = inlined_call_operand.vmem [shape: f32[6,2], index: 1, kind: input, shape index: {}]
  %s2 = inlined_call_operand.hbm [shape: f32[6,256], index: 2, kind: output, shape index: {}]
  %s3 = sld [smem:[#allocation0]]
  $region22: #{tpu_custom_call.1} parent=0
    _
  %s5 = ssub.s32 1, %s3
  %s6 = scalar_select 0, %s5, %s3
  $region1: #{tpu_custom_call.1} parent=0
    #allocation2 [shape = 'u8[8192]{0}', space=vmem, size = 0x2000, scoped, tag = 'input window, operand 0, single buffered']
    #allocation3 [shape = 's32[1]{0}', space=sflag, size = 0x4, scoped, tag = 'scoped memory for tpu_custom_call.1']
    #allocation4 [shape = 's32[1]{0}', space=sflag, size = 0x4, scoped, tag = 'scoped memory for tpu_custom_call.1']
    #allocation5 [shape = 'u8[8192]{0}', space=vmem, size = 0x2000, scoped, tag = 'output window, operand 0, single buffered']
    %7 = vsyncpa [#allocation3], 0
    %8 = vsyncpa [#allocation4], 0
    // Predicated region
    $region2: #{tpu_custom_call.1} parent=1 // pred_check
      _
    $region3: #{tpu_custom_call.1} parent=1 // pred_check_branch
      %10 = sbr.rel (0) target = $region5
    $region4: #{tpu_custom_call.1} parent=1 // pred_region
      %s12 = ssub.s32 256, 256
      %13 = vsyncadd [#allocation3], %s12
      %s15 = sshll.u32 [#allocation2], 4
      %s16 = int_to_ptr.vmem [resolvable:$true] %s15
      %18 = dma.hbm_to_vmem [thread:$0]  %s0, 256, %s16, [#allocation3]
    $region5: #{tpu_custom_call.1} parent=1 // pred_fallthru
      _
    // Predicated region
    $region6: #{tpu_custom_call.1} parent=1 // pred_check
      _
    $region7: #{tpu_custom_call.1} parent=1 // pred_check_branch
      %20 = sbr.rel (0) target = $region9
    $region8: #{tpu_custom_call.1} parent=1 // pred_region
      _
    $region9: #{tpu_custom_call.1} parent=1 // pred_fallthru
      _
    // Predicated region
    $region10: #{tpu_custom_call.1} parent=1 // pred_check
      _
    $region11: #{tpu_custom_call.1} parent=1 // pred_check_branch
      %22 = sbr.rel (0) target = $region13
    $region12: #{tpu_custom_call.1} parent=1 // pred_region
      %23 = dma.done [#allocation3], 256
    $region13: #{tpu_custom_call.1} parent=1 // pred_fallthru
      _
    %v24 = vld [vmem:[#allocation2] sm:$0x3f]
    %v25 = vld [vmem:[#allocation2 + $0x8] sm:$0x3f]
    %v26 = vld [vmem:[%s1] sm:$0x3f]
    %28 = vset.pattern.permute.xlu0 0
    %29 = vperm.xlu0 %28, %v26
    %v30 = vpop.permute.xlu0 %29
    %v32 = vsub.f32 %v24, %v30
    %v33 = vsub.f32 %v25, %v30
    %34 = vset.pattern.permute.xlu0 1
    %35 = vperm.xlu0 %34, %v26
    %v36 = vpop.permute.xlu0 %35
    %v38 = vmul.f32 %v32, %v36
    %v39 = vmul.f32 %v33, %v36
    %40 = vst [vmem:[#allocation5] sm:$0x3f] %v38
    %41 = vst [vmem:[#allocation5 + $0x8] sm:$0x3f] %v39
    // Predicated region
    $region14: #{tpu_custom_call.1} parent=1 // pred_check
      _
    $region15: #{tpu_custom_call.1} parent=1 // pred_check_branch
      %43 = sbr.rel (0) target = $region17
    $region16: #{tpu_custom_call.1} parent=1 // pred_region
      %s45 = ssub.s32 256, 256
      %46 = vsyncadd [#allocation4], %s45
      %s48 = sshll.u32 [#allocation5], 4
      %s49 = int_to_ptr.vmem [resolvable:$true] %s48
      %51 = dma.vmem_to_hbm [thread:$0]  %s49, 256, %s2, [#allocation4]
    $region17: #{tpu_custom_call.1} parent=1 // pred_fallthru
      _
    // Predicated region
    $region18: #{tpu_custom_call.1} parent=1 // pred_check
      _
    $region19: #{tpu_custom_call.1} parent=1 // pred_check_branch
      %53 = sbr.rel (0) target = $region21
    $region20: #{tpu_custom_call.1} parent=1 // pred_region
      %54 = dma.done [#allocation4], 256
    $region21: #{tpu_custom_call.1} parent=1 // pred_fallthru
      _
    %55 = vsyncpa [#allocation3], 1
    %56 = vsyncpa [#allocation4], 1

</llo_original>
